<compile_context>
chip_gen: v7x
topology: tpu7x:2x2x1
jax: 0.10.0
libtpu: 0.0.40
codegen_flags: <defaults>
</compile_context>

<pallas_src>
import functools

import jax
import jax.numpy as jnp
from jax.experimental import pallas as pl
from jax.experimental.pallas import tpu as pltpu


# -----------------------------------------------------------------------------
# Stage 1: fused per-node projections over all B*N rows.
#   weight column order: [ w_film | w_film_skip | w_skip | w_r ]
#   p columns          : [ beta | gamma | beta_s | gamma_s | h_skip | h ]
#   output columns     : [ beta | gamma | out_skip | h ]   (4*C_out, lane-dense)
# -----------------------------------------------------------------------------
def _proj_kernel(x_ref, w_ref, b_ref, out_ref, *, c_out):
    c = c_out
    p = jnp.dot(x_ref[...], w_ref[...],
                preferred_element_type=jnp.float32) + b_ref[...]        # (TM, 6C)
    out_skip = jnp.maximum(
        p[:, 3 * c:4 * c] * p[:, 4 * c:5 * c] + p[:, 2 * c:3 * c], 0.0)  # relu(g_s*h_s+b_s)
    out_ref[...] = jnp.concatenate(
        [p[:, 0:2 * c], out_skip, p[:, 5 * c:6 * c]], axis=-1).astype(out_ref.dtype)


# -----------------------------------------------------------------------------
# Stage 2: neighbor aggregation.  grid = (B, n_i, n_j); j innermost / arbitrary.
#   proj_ref    : (1, TI_BLK, 4C) resident per (b, i)  -> beta/gamma/skip slices
#   ht_ref      : (1, C, JT)      source h, transposed -> JT on lanes
#   adj_ref     : (1, TI_BLK, JT) bf16 adjacency slab  -> JT on lanes
#   deg_inv_ref : (1, TI_BLK, 1)  precomputed 1/max(deg,1), used only at the last j
#   y_ref       : (1, TI_BLK, C)  pre-norm output, resident across j
#   acc_ref     : VMEM (TI_BLK, C) f32 accumulator
# -----------------------------------------------------------------------------
def _agg_kernel(proj_ref, ht_ref, adj_ref, deg_inv_ref, y_ref, acc_ref,
                *, c_out, ti, nt):
    c = c_out
    j = pl.program_id(2)

    @pl.when(j == 0)
    def _():
        acc_ref[...] = jnp.zeros_like(acc_ref)

    h_t = ht_ref[0]                                               # (C, JT), f32

    def body(it, carry):
        i0 = pl.multiple_of(it * ti, ti)
        beta = proj_ref[0, pl.ds(i0, ti), pl.ds(0, c)]            # (ti, C)
        gamma = proj_ref[0, pl.ds(i0, ti), pl.ds(c, c)]           # (ti, C)
        a = adj_ref[0, pl.ds(i0, ti), :].astype(jnp.float32)      # (ti, JT)
        # (ti, C, JT): neighbor axis on the 128 lanes -> dense VPU work.
        msg = jnp.maximum(gamma[:, :, None] * h_t[None, :, :] + beta[:, :, None], 0.0)
        # Masked lane-reduce over neighbors (XLU).
        acc_ref[pl.ds(i0, ti), :] += jnp.sum(msg * a[:, None, :], axis=-1)
        return carry

    jax.lax.fori_loop(0, nt, body, 0, unroll=False)

    @pl.when(j == pl.num_programs(2) - 1)
    def _():
        skip = proj_ref[0, :, pl.ds(2 * c, c)]                    # (TI_BLK, C)
        y_ref[0] = (skip + acc_ref[...] * deg_inv_ref[0]).astype(y_ref.dtype)


# -----------------------------------------------------------------------------
# Stage 3: GraphNorm over the node axis, one graph per grid step.
# -----------------------------------------------------------------------------
def _graphnorm_kernel(y_ref, scale_ref, weight_ref, bias_ref, out_ref, *, eps):
    y = y_ref[0].astype(jnp.float32)                              # (N, C)
    mean = jnp.mean(y, axis=0, keepdims=True)                     # (1, C)
    centered = y - scale_ref[...] * mean
    var = jnp.mean(centered * centered, axis=0, keepdims=True)
    out_ref[0] = (weight_ref[...] * centered * jax.lax.rsqrt(var + eps)
                  + bias_ref[...]).astype(out_ref.dtype)


def _pick_tile(n, candidates):
    for cand in candidates:
        if n % cand == 0 and n >= cand:
            return cand
    return n


def dense_graph_conv(x, adj, params):
    B, N, C_in = x.shape
    C_out = params["w_r"].shape[1]
    c = C_out

    # Fused projection weight/bias (tiny trace-time concat).
    w_fused = jnp.concatenate(
        [params["w_film"], params["w_film_skip"], params["w_skip"], params["w_r"]],
        axis=1)                                                    # (C_in, 6C)
    b_fused = jnp.concatenate(
        [params["b_film"], jnp.zeros((1, 4 * C_out), jnp.float32)], axis=1)  # (1, 6C)

    # -------- Stage 1: projections over all B*N rows (batch folded into MXU M) -----
    total = B * N
    tm = _pick_tile(total, (512, 256, 128, 64, 32, 16, 8))   # capped; never one giant tile
    x2d = x.reshape(total, C_in)

    proj = pl.pallas_call(
        functools.partial(_proj_kernel, c_out=C_out),
        out_shape=jax.ShapeDtypeStruct((total, 4 * C_out), jnp.float32),
        grid=(total // tm,),
        in_specs=[
            pl.BlockSpec((tm, C_in), lambda m: (m, 0)),
            pl.BlockSpec((C_in, 6 * C_out), lambda m: (0, 0)),
            pl.BlockSpec((1, 6 * C_out), lambda m: (0, 0)),
        ],
        out_specs=pl.BlockSpec((tm, 4 * C_out), lambda m: (m, 0)),
        compiler_params=pltpu.CompilerParams(dimension_semantics=("parallel",)),
    )(x2d, w_fused, b_fused)
    proj = proj.reshape(B, N, 4 * C_out)

    # -------- Wrapper plumbing (tiny XLA ops, keeps kernels lane-dense) ------------
    # Source-side h, transposed so the neighbor axis sits on lanes in the kernel.
    h_t = jnp.transpose(proj[:, :, 3 * c:4 * c], (0, 2, 1))       # (B, C, N)
    # Degree reciprocal once, outside the hot loop.
    deg = jnp.sum(adj, axis=-1, keepdims=True)
    deg_inv = 1.0 / jnp.maximum(deg, 1.0)                          # (B, N, 1)
    # Adjacency streamed as bf16 (exact for 0/1) -> half the HBM traffic.
    adj_b = adj.astype(jnp.bfloat16)

    # -------- Stage 2: aggregation, grid (B, n_i, n_j) -----------------------------
    ti_blk = _pick_tile(N, (128, 64, 32, 16, 8))   # target-node block (parallel axis)
    jt = _pick_tile(N, (128, 64))                  # neighbor slab = lane width
    ti = 8 if ti_blk % 8 == 0 else ti_blk          # inner sub-tile (vreg-sized work)
    nt = ti_blk // ti
    n_i, n_j = N // ti_blk, N // jt

    y_pre = pl.pallas_call(
        functools.partial(_agg_kernel, c_out=C_out, ti=ti, nt=nt),
        out_shape=jax.ShapeDtypeStruct((B, N, C_out), jnp.float32),
        grid=(B, n_i, n_j),
        in_specs=[
            pl.BlockSpec((1, ti_blk, 4 * C_out), lambda b, i, j: (b, i, 0)),
            pl.BlockSpec((1, C_out, jt),         lambda b, i, j: (b, 0, j)),
            pl.BlockSpec((1, ti_blk, jt),        lambda b, i, j: (b, i, j)),
            pl.BlockSpec((1, ti_blk, 1),         lambda b, i, j: (b, i, 0)),
        ],
        out_specs=pl.BlockSpec((1, ti_blk, C_out), lambda b, i, j: (b, i, 0)),
        scratch_shapes=[pltpu.VMEM((ti_blk, C_out), jnp.float32)],
        compiler_params=pltpu.CompilerParams(
            dimension_semantics=("parallel", "parallel", "arbitrary")),
    )(proj, h_t, adj_b, deg_inv)

    # -------- Stage 3: GraphNorm per graph ------------------------------------------
    y = pl.pallas_call(
        functools.partial(_graphnorm_kernel, eps=1e-5),
        out_shape=jax.ShapeDtypeStruct((B, N, C_out), x.dtype),
        grid=(B,),
        in_specs=[
            pl.BlockSpec((1, N, C_out), lambda b: (b, 0, 0)),
            pl.BlockSpec((1, C_out), lambda b: (0, 0)),
            pl.BlockSpec((1, C_out), lambda b: (0, 0)),
            pl.BlockSpec((1, C_out), lambda b: (0, 0)),
        ],
        out_specs=pl.BlockSpec((1, N, C_out), lambda b: (b, 0, 0)),
        compiler_params=pltpu.CompilerParams(dimension_semantics=("parallel",)),
    )(y_pre, params["gn_mean_scale"], params["gn_weight"], params["gn_bias"])

    # Residual concat in the wrapper keeps kernel outputs lane-dense.
    return jnp.concatenate([y, x], axis=-1)


def init_params(key, c_in, c_out):
    ks = jax.random.split(key, 5)

    def glorot(k, shape):
        fan_in, fan_out = shape
        lim = (6.0 / (fan_in + fan_out)) ** 0.5
        return jax.random.uniform(k, shape, jnp.float32, -lim, lim)

    return dict(
        w_r=glorot(ks[0], (c_in, c_out)),                       # lin (no bias)
        w_film=glorot(ks[1], (c_in, 2 * c_out)),                # film (with bias)
        b_film=0.1 * jax.random.normal(ks[4], (1, 2 * c_out), jnp.float32),
        w_skip=glorot(ks[2], (c_in, c_out)),                    # lin_skip (no bias)
        w_film_skip=glorot(ks[3], (c_in, 2 * c_out)),           # film_skip (no bias)
        gn_mean_scale=jnp.ones((1, c_out), jnp.float32),
        gn_weight=jnp.ones((1, c_out), jnp.float32),
        gn_bias=jnp.zeros((1, c_out), jnp.float32),
    )


def reference(x, adj, p):
    """Pure-JAX reference of the same forward semantics."""
    c_out = p["w_r"].shape[1]
    film_s = x @ p["w_film_skip"]
    beta_s, gamma_s = film_s[..., :c_out], film_s[..., c_out:]
    out_skip = jax.nn.relu(gamma_s * (x @ p["w_skip"]) + beta_s)

    film = x @ p["w_film"] + p["b_film"]
    beta, gamma = film[..., :c_out], film[..., c_out:]
    h = x @ p["w_r"]
    msg = jax.nn.relu(gamma[:, :, None, :] * h[:, None, :, :] + beta[:, :, None, :])
    deg = jnp.sum(adj, axis=-1, keepdims=True)
    agg = jnp.sum(adj[..., None] * msg, axis=2) / jnp.maximum(deg, 1.0)
    y = out_skip + agg

    mean = jnp.mean(y, axis=1, keepdims=True)
    centered = y - p["gn_mean_scale"] * mean
    var = jnp.mean(centered * centered, axis=1, keepdims=True)
    y = p["gn_weight"] * centered * jax.lax.rsqrt(var + 1e-5) + p["gn_bias"]
    return jnp.concatenate([y, x], axis=-1)


def _run_case(key, B, N, C_in, C_out):
    kx, ka, kp = jax.random.split(key, 3)
    x = jax.random.normal(kx, (B, N, C_in), jnp.float32)
    adj = (jax.random.uniform(ka, (B, N, N)) < 0.4).astype(jnp.float32)
    params = init_params(kp, C_in, C_out)

    out = jax.block_until_ready(dense_graph_conv(x, adj, params))
    ref = reference(x, adj, params)
    assert out.shape == (B, N, C_out + C_in), out.shape
    assert jnp.allclose(out, ref, atol=1e-4, rtol=1e-4), "mismatch vs reference"


if __name__ == "__main__":
    key = jax.random.PRNGKey(0)
    k1, k2 = jax.random.split(key)

    # Small case (matches the module's typical dense-graph use).
    _run_case(k1, B=2, N=16, C_in=16, C_out=32)
    # Larger case exercising target-node tiling (n_i=2) and neighbor slabs (n_j=2).
    _run_case(k2, B=2, N=256, C_in=16, C_out=32)

    print("KERNEL_OK")
</pallas_src>

<mosaic_0001>
module attributes {stable_mosaic.version = 11 : i64} {
  func.func @_proj_kernel(%arg0: i32, %arg1: memref<32x16xf32, #tpu.memory_space<vmem>>, %arg2: memref<16x192xf32, #tpu.memory_space<vmem>>, %arg3: memref<1x192xf32, #tpu.memory_space<vmem>>, %arg4: memref<32x128xf32, #tpu.memory_space<vmem>>) attributes {dimension_semantics = [#tpu.dimension_semantics<parallel>], iteration_bounds = array<i64: 1>, scalar_prefetch = 0 : i64, scratch_operands = 0 : i64, tpu.core_type = #tpu.core_type<tc>, window_params = [{transform_indices = @transform_0, window_bounds = array<i64: 32, 16>}, {pipeline_mode = #tpu.pipeline_mode<synchronous>, transform_indices = @transform_1, window_bounds = array<i64: 16, 192>}, {pipeline_mode = #tpu.pipeline_mode<synchronous>, transform_indices = @transform_2, window_bounds = array<i64: 1, 192>}, {transform_indices = @transform_3, window_bounds = array<i64: 32, 128>}]} {
    %c0 = arith.constant 0 : index
    %c0_0 = arith.constant 0 : index
    %0 = vector.load %arg1[%c0, %c0_0] : memref<32x16xf32, #tpu.memory_space<vmem>>, vector<32x16xf32>
    %c0_1 = arith.constant 0 : index
    %c0_2 = arith.constant 0 : index
    %1 = vector.load %arg2[%c0_1, %c0_2] : memref<16x192xf32, #tpu.memory_space<vmem>>, vector<16x192xf32>
    %cst = arith.constant dense<0.000000e+00> : vector<32x192xf32>
    %2 = tpu.matmul %0, %1, %cst {dimension_numbers = #tpu.dot_dimension_numbers<[1], [0], [0], [1], [0, 0, 1, 1], [], []>} : vector<32x16xf32>, vector<16x192xf32>, vector<32x192xf32> -> vector<32x192xf32>
    %c0_3 = arith.constant 0 : index
    %c0_4 = arith.constant 0 : index
    %3 = vector.load %arg3[%c0_3, %c0_4] : memref<1x192xf32, #tpu.memory_space<vmem>>, vector<1x192xf32>
    %4 = vector.broadcast %3 : vector<1x192xf32> to vector<32x192xf32>
    %5 = arith.addf %2, %4 : vector<32x192xf32>
    %6 = vector.extract_strided_slice %5 {offsets = [0, 96], sizes = [32, 32], strides = [1, 1]} : vector<32x192xf32> to vector<32x32xf32>
    %7 = vector.extract_strided_slice %5 {offsets = [0, 128], sizes = [32, 32], strides = [1, 1]} : vector<32x192xf32> to vector<32x32xf32>
    %8 = arith.mulf %6, %7 : vector<32x32xf32>
    %9 = vector.extract_strided_slice %5 {offsets = [0, 64], sizes = [32, 32], strides = [1, 1]} : vector<32x192xf32> to vector<32x32xf32>
    %10 = arith.addf %8, %9 : vector<32x32xf32>
    %cst_5 = arith.constant 0.000000e+00 : f32
    %11 = vector.broadcast %cst_5 : f32 to vector<32x32xf32>
    %12 = arith.maximumf %10, %11 : vector<32x32xf32>
    %13 = vector.extract_strided_slice %5 {offsets = [0, 0], sizes = [32, 64], strides = [1, 1]} : vector<32x192xf32> to vector<32x64xf32>
    %14 = vector.extract_strided_slice %5 {offsets = [0, 160], sizes = [32, 32], strides = [1, 1]} : vector<32x192xf32> to vector<32x32xf32>
    %15 = tpu.concatenate %13, %12, %14 in 1 : vector<32x64xf32>, vector<32x32xf32>, vector<32x32xf32> -> vector<32x128xf32>
    %c0_6 = arith.constant 0 : index
    %c0_7 = arith.constant 0 : index
    %16 = vector.load %arg4[%c0_6, %c0_7] : memref<32x128xf32, #tpu.memory_space<vmem>>, vector<32x128xf32>
    tpu.vector_store %arg4[%c0_6, %c0_7], %15 {strides = array<i32>} : memref<32x128xf32, #tpu.memory_space<vmem>>, vector<32x128xf32>,
    return
  }
  func.func @transform_0(%arg0: i32) -> (i32, i32) {
    %c0_i32 = arith.constant 0 : i32
    %c0_i32_0 = arith.constant 0 : i32
    return %arg0, %c0_i32 : i32, i32
  }
  func.func @transform_1(%arg0: i32) -> (i32, i32) {
    %c0_i32 = arith.constant 0 : i32
    %c0_i32_0 = arith.constant 0 : i32
    %c0_i32_1 = arith.constant 0 : i32
    return %c0_i32, %c0_i32_0 : i32, i32
  }
  func.func @transform_2(%arg0: i32) -> (i32, i32) {
    %c0_i32 = arith.constant 0 : i32
    %c0_i32_0 = arith.constant 0 : i32
    %c0_i32_1 = arith.constant 0 : i32
    return %c0_i32, %c0_i32_0 : i32, i32
  }
  func.func @transform_3(%arg0: i32) -> (i32, i32) {
    %c0_i32 = arith.constant 0 : i32
    %c0_i32_0 = arith.constant 0 : i32
    return %arg0, %c0_i32 : i32, i32
  }
}

</mosaic_0001>

<llo_original>
// kernel: tpu_custom_call.1
$region0: #{tpu_custom_call.1}
  #allocation0 [shape = 'u32[]', space=smem, size = 0x4, offset = 0x4, fixed_abs, tag = 'smem constant byte address 0x4 - core index']
  #allocation1 [shape = 'u32[144,128]{1,0:T(1,128)}', space=vmem, size = 0x12000, scoped, tag = 'internal scratch']
  %s0 = inlined_call_operand.vmem [shape: f32[32,16], index: 0, kind: input, shape index: {}]
  %s1 = inlined_call_operand.vmem [shape: f32[16,192], index: 1, kind: input, shape index: {}]
  %s2 = inlined_call_operand.vmem [shape: f32[1,192], index: 2, kind: input, shape index: {}]
  %s3 = inlined_call_operand.hbm [shape: f32[32,128], index: 3, kind: output, shape index: {}]
  %s4 = sld [smem:[#allocation0]]
  $region22: #{tpu_custom_call.1} parent=0
    _
  %s6 = ssub.s32 1, %s4
  %s7 = scalar_select 0, %s6, %s4
  $region1: #{tpu_custom_call.1} parent=0
    #allocation2 [shape = 'u8[16384]{0}', space=vmem, size = 0x4000, scoped, tag = 'output window, operand 0, single buffered']
    #allocation3 [shape = 's32[1]{0}', space=sflag, size = 0x4, scoped, tag = 'scoped memory for tpu_custom_call.1']
    %8 = vsyncpa [#allocation3], 0
    // Predicated region
    $region2: #{tpu_custom_call.1} parent=1 // pred_check
      _
    $region3: #{tpu_custom_call.1} parent=1 // pred_check_branch
      %10 = sbr.rel (0) target = $region5
    $region4: #{tpu_custom_call.1} parent=1 // pred_region
      _
    $region5: #{tpu_custom_call.1} parent=1 // pred_fallthru
      _
    // Predicated region
    $region6: #{tpu_custom_call.1} parent=1 // pred_check
      _
    $region7: #{tpu_custom_call.1} parent=1 // pred_check_branch
      %12 = sbr.rel (0) target = $region9
    $region8: #{tpu_custom_call.1} parent=1 // pred_region
      _
    $region9: #{tpu_custom_call.1} parent=1 // pred_fallthru
      _
    // Predicated region
    $region10: #{tpu_custom_call.1} parent=1 // pred_check
      _
    $region11: #{tpu_custom_call.1} parent=1 // pred_check_branch
      %14 = sbr.rel (0) target = $region13
    $region12: #{tpu_custom_call.1} parent=1 // pred_region
      _
    $region13: #{tpu_custom_call.1} parent=1 // pred_fallthru
      _
    %v15 = vld [vmem:[%s0] sm:$0xff]
    %v16 = vld [vmem:[%s0 + $0x8] sm:$0xff]
    %v17 = vld [vmem:[%s0 + $0x10] sm:$0xff]
    %v18 = vld [vmem:[%s0 + $0x18] sm:$0xff]
    %v19 = vld [vmem:[%s1] sm:$0xff]
    %v20 = vld [vmem:[%s1 + $0x8] sm:$0xff]
    %v21 = vld [vmem:[%s1 + $0x10] sm:$0xff]
    %v22 = vld [vmem:[%s1 + $0x18] sm:$0xff]
    %v23 = vld [vmem:[%s2] sm:$0x3]
    %v25 = vlaneseq
    %v26 = vshrl.u32 %v25, 7
    %v27 = vsub.s32 0, %v26
    %v28 = vrot.slane %v23, %v27
    %v29 = vlaneseq
    %v30 = vshrl.u32 %v29, 7
    %v31 = vsub.s32 1, %v30
    %v32 = vrot.slane %v23, %v31
    %vm35 = vcmask 130048
    %v37 = vsel %vm35, %v15, 0
    %v40 = vsel %vm35, %v16, 0
    %v43 = vsel %vm35, %v17, 0
    %v46 = vsel %vm35, %v18, 0
    %48 = vmatprep.subr.mxu0 %v20
    %49 = vmatpush1.msra.mxu0 %v19
    %50 = vmatprep.subr.mxu0 %v22
    %51 = vmatpush1.msra.mxu0 %v21
    %52 = vmatprep.subr.mxu0 0.0
    %53 = vmatpush1.msra.mxu0 0.0
    %54 = vmatprep.subr.mxu0 0.0
    %55 = vmatpush1.msra.mxu0 0.0
    %56 = vmatprep.subr.mxu0 0.0
    %57 = vmatpush1.msra.mxu0 0.0
    %58 = vmatprep.subr.mxu0 0.0
    %59 = vmatpush1.msra.mxu0 0.0
    %60 = vmatprep.subr.mxu0 0.0
    %61 = vmatpush1.msra.mxu0 0.0
    %62 = vmatprep.subr.mxu0 0.0
    %63 = vmatpush1.msra.mxu0 0.0
    %64 = vmatprep.subr.mxu0 0.0
    %65 = vmatpush1.msra.mxu0 0.0
    %66 = vmatprep.subr.mxu0 0.0
    %67 = vmatpush1.msra.mxu0 0.0
    %68 = vmatprep.subr.mxu0 0.0
    %69 = vmatpush1.msra.mxu0 0.0
    %70 = vmatprep.subr.mxu0 0.0
    %71 = vmatpush1.msra.mxu0 0.0
    %72 = vmatprep.subr.mxu0 0.0
    %73 = vmatpush1.msra.mxu0 0.0
    %74 = vmatprep.subr.mxu0 0.0
    %75 = vmatpush1.msra.mxu0 0.0
    %76 = vmatprep.subr.mxu0 0.0
    %77 = vmatpush1.msra.mxu0 0.0
    %78 = vmatprep.subr.mxu0 0.0
    %79 = vmatpush1.msra.mxu0 0.0
    %80 = vmatprep.subr.mxu0 0.0
    %81 = vmatpush1.msra.mxu0 0.0
    %82 = vmatprep.subr.mxu0 0.0
    %83 = vmatpush1.msra.mxu0 0.0
    %84 = vmatprep.subr.mxu0 0.0
    %85 = vmatpush1.msra.mxu0 0.0
    %86 = vmatprep.subr.mxu0 0.0
    %87 = vmatpush1.msra.mxu0 0.0
    %88 = vmatprep.subr.mxu0 0.0
    %89 = vmatpush1.msra.mxu0 0.0
    %90 = vmatprep.subr.mxu0 0.0
    %91 = vmatpush1.msra.mxu0 0.0
    %92 = vmatprep.subr.mxu0 0.0
    %93 = vmatpush1.msra.mxu0 0.0
    %94 = vmatprep.subr.mxu0 0.0
    %95 = vmatpush1.msra.mxu0 0.0
    %96 = vmatprep.subr.mxu0 0.0
    %97 = vmatpush1.msra.mxu0 0.0
    %98 = vmatprep.subr.mxu0 0.0
    %99 = vmatpush1.msra.mxu0 0.0
    %100 = vmatprep.subr.mxu0 0.0
    %101 = vmatpush1.msra.mxu0 0.0
    %102 = vmatprep.subr.mxu0 0.0
    %103 = vmatpush1.msra.mxu0 0.0
    %104 = vmatprep.subr.mxu0 0.0
    %105 = vmatpush1.msra.mxu0 0.0
    %106 = vmatprep.subr.mxu0 0.0
    %107 = vmatpush1.msra.mxu0 0.0
    %108 = vmatprep.subr.mxu0 0.0
    %109 = vmatpush1.msra.mxu0 0.0
    %110 = vmatprep.subr.mxu0 0.0
    %111 = vmatpush1.msra.mxu0 0.0
    %112 = vmatprep.mubr.f32.mxu0 0.0
    %113 = vmatmul.mubr.f32.gmra.mrb[0].mxu0 %v37
    %v114 = vpop.f32.mrb[0].mxu0
    %v115 = vadd.f32 %v28, %v114
    %v116 = vpop.f32.mrb[0].mxu0
    %v117 = vadd.f32 %v32, %v116
    %118 = vmatprep.mubr.f32.mxu0 0.0
    %119 = vmatmul.mubr.f32.gmra.mrb[0].mxu0 %v40
    %v120 = vpop.f32.mrb[0].mxu0
    %v121 = vadd.f32 %v28, %v120
    %v122 = vpop.f32.mrb[0].mxu0
    %v123 = vadd.f32 %v32, %v122
    %124 = vmatprep.mubr.f32.mxu0 0.0
    %125 = vmatmul.mubr.f32.gmra.mrb[0].mxu0 %v43
    %v126 = vpop.f32.mrb[0].mxu0
    %v127 = vadd.f32 %v28, %v126
    %v128 = vpop.f32.mrb[0].mxu0
    %v129 = vadd.f32 %v32, %v128
    %130 = vmatprep.mubr.f32.mxu0 0.0
    %131 = vmatmul.mubr.f32.gmra.mrb[0].mxu0 %v46
    %v132 = vpop.f32.mrb[0].mxu0
    %v133 = vadd.f32 %v28, %v132
    %v134 = vpop.f32.mrb[0].mxu0
    %v135 = vadd.f32 %v32, %v134
    %136 = vdwg.mxu0
    %141 = vrot.lane.b32.xlu0 %v117, 96
    %v142 = vpop.permute.xlu0 %141
    %143 = vrot.lane.b32.xlu0 %v123, 96
    %v144 = vpop.permute.xlu0 %143
    %145 = vrot.lane.b32.xlu0 %v129, 96
    %v146 = vpop.permute.xlu0 %145
    %147 = vrot.lane.b32.xlu0 %v135, 96
    %v148 = vpop.permute.xlu0 %147
    %v153 = vmul.f32 %v115, %v142
    %v154 = vmul.f32 %v121, %v144
    %v155 = vmul.f32 %v127, %v146
    %v156 = vmul.f32 %v133, %v148
    %161 = vrot.lane.b32.xlu0 %v115, 32
    %v162 = vpop.permute.xlu0 %161
    %163 = vrot.lane.b32.xlu0 %v121, 32
    %v164 = vpop.permute.xlu0 %163
    %165 = vrot.lane.b32.xlu0 %v127, 32
    %v166 = vpop.permute.xlu0 %165
    %167 = vrot.lane.b32.xlu0 %v133, 32
    %v168 = vpop.permute.xlu0 %167
    %v173 = vadd.f32 %v153, %v162
    %v174 = vadd.f32 %v154, %v164
    %v175 = vadd.f32 %v155, %v166
    %v176 = vadd.f32 %v156, %v168
    %v177 = vmax.f32 %v173, 0.0
    %v178 = vmax.f32 %v174, 0.0
    %v179 = vmax.f32 %v175, 0.0
    %v180 = vmax.f32 %v176, 0.0
    %185 = vrot.lane.b32.xlu0 %v177, 96
    %v186 = vpop.permute.xlu0 %185
    %187 = vrot.lane.b32.xlu0 %v178, 96
    %v188 = vpop.permute.xlu0 %187
    %189 = vrot.lane.b32.xlu0 %v179, 96
    %v190 = vpop.permute.xlu0 %189
    %191 = vrot.lane.b32.xlu0 %v180, 96
    %v192 = vpop.permute.xlu0 %191
    %197 = vrot.lane.b32.xlu0 %v117, 64
    %v198 = vpop.permute.xlu0 %197
    %199 = vrot.lane.b32.xlu0 %v123, 64
    %v200 = vpop.permute.xlu0 %199
    %201 = vrot.lane.b32.xlu0 %v129, 64
    %v202 = vpop.permute.xlu0 %201
    %203 = vrot.lane.b32.xlu0 %v135, 64
    %v204 = vpop.permute.xlu0 %203
    %vm209 = vcmask 523264
    %v210 = vsel %vm209, %v115, %v186
    %v211 = vsel %vm209, %v121, %v188
    %v212 = vsel %vm209, %v127, %v190
    %v213 = vsel %vm209, %v133, %v192
    %vm214 = vcmask 785408
    %v215 = vsel %vm214, %v210, %v198
    %v216 = vsel %vm214, %v211, %v200
    %v217 = vsel %vm214, %v212, %v202
    %v218 = vsel %vm214, %v213, %v204
    %219 = vst [vmem:[#allocation2] sm:$0xff] %v215
    %220 = vst [vmem:[#allocation2 + $0x8] sm:$0xff] %v216
    %221 = vst [vmem:[#allocation2 + $0x10] sm:$0xff] %v217
    %222 = vst [vmem:[#allocation2 + $0x18] sm:$0xff] %v218
    // Predicated region
    $region14: #{tpu_custom_call.1} parent=1 // pred_check
      _
    $region15: #{tpu_custom_call.1} parent=1 // pred_check_branch
      %224 = sbr.rel (0) target = $region17
    $region16: #{tpu_custom_call.1} parent=1 // pred_region
      %s226 = ssub.s32 512, 512
      %227 = vsyncadd [#allocation3], %s226
      %s228 = sshll.u32 [#allocation2], 4
      %s229 = int_to_ptr.vmem [resolvable:$true] %s228
      %234 = dma.vmem_to_hbm [thread:$0]  %s229, 512, %s3, [#allocation3], 128, 128, 8
    $region17: #{tpu_custom_call.1} parent=1 // pred_fallthru
      _
    // Predicated region
    $region18: #{tpu_custom_call.1} parent=1 // pred_check
      _
    $region19: #{tpu_custom_call.1} parent=1 // pred_check_branch
      %236 = sbr.rel (0) target = $region21
    $region20: #{tpu_custom_call.1} parent=1 // pred_region
      %237 = dma.done [#allocation3], 512
    $region21: #{tpu_custom_call.1} parent=1 // pred_fallthru
      _
    %238 = vsyncpa [#allocation3], 1

</llo_original>
